<compile_context>
chip_gen: v5e
topology: v5e:2x2
jax: 0.10.0
libtpu: 0.0.40
codegen_flags: <defaults>
</compile_context>

<pallas_src>
import math

import jax
import jax.numpy as jnp
from jax.experimental import pallas as pl
from jax.experimental.pallas import tpu as pltpu


def _single_attention_kernel(hist_ref, catt_ref, bias_ref, wh_ref, wv_ref,
                             att_ref, score_ref):
    Bb, S = bias_ref.shape
    H = hist_ref.shape[-1]
    A = wh_ref.shape[-1]

    h2 = hist_ref[...]                                       # (Bb*S, H) bf16

    # Scoring matmul: one MXU pass over all Bb*S rows, f32 accumulation.
    h_att = jnp.dot(h2, wh_ref[...],
                    preferred_element_type=jnp.float32)      # (Bb*S, A)
    t = jnp.tanh(h_att.reshape(Bb, S, A) + catt_ref[...][:, None, :])

    # v-projection (lane reduce over A) + pre-folded -inf mask bias.
    score = jnp.sum(t * wv_ref[...], axis=-1) + bias_ref[...]   # (Bb, S) f32

    # Softmax over S. Clamping smax keeps fully-masked / padded rows finite
    # (exp(-inf - (-1e30)) == 0), so denom == 0 flags those rows explicitly.
    smax = jnp.maximum(jnp.max(score, axis=-1, keepdims=True), -1e30)
    e = jnp.exp(score - smax)                                 # masked pos -> 0 exactly
    denom = jnp.sum(e, axis=-1, keepdims=True)                # (Bb, 1)
    p = e * pl.reciprocal(denom, approx=True)
    p = jnp.where(denom > 0.0, p, 0.0)     # zero fully-masked / batch-padded rows
    score_ref[...] = p.astype(score_ref.dtype)

    # Attention apply: VPU weighted sum over S (no per-batch M=1 MXU matmuls).
    h3 = h2.astype(jnp.float32).reshape(Bb, S, H)
    att = jnp.sum(p[:, :, None] * h3, axis=1)                 # (Bb, H)
    att_ref[...] = att.astype(att_ref.dtype)


def single_attention(history, context, a_mask, b_mask, wh, wc, wv_row, *,
                     block_b=32, matmul_dtype=jnp.bfloat16):
    """Pallas implementation of SingleAttention.forward (att / softmax).

    history: (B, S, H)   context: (B, C)   a_mask/b_mask: (B, S) bool
    wh: (H, A)  wc: (C, A)  wv_row: (1, A)   (nn.Linear weights, pre-transposed)

    Returns (att_applied (B, H), combined_scores (B, 1, S)).
    """
    B, S, H = history.shape
    A = wh.shape[-1]
    out_dtype = history.dtype

    # ---- wrapper-side prep (cheap XLA ops) --------------------------------
    # Hoisted context projection: one batched matmul instead of per-block M=1.
    c_att = jnp.dot(context, wc).astype(jnp.float32)                    # (B, A)
    # Pre-folded additive mask bias (module semantics: mask = ~(a | b)).
    bias = jnp.where(~(a_mask | b_mask), -jnp.inf, 0.0).astype(jnp.float32)  # (B, S)
    # bf16 feeds for the MXU; accumulation and elementwise math stay f32.
    hist_mm = history.astype(matmul_dtype)
    wh_mm = wh.astype(matmul_dtype)
    wv_f32 = wv_row.astype(jnp.float32).reshape(1, A)

    # ---- batch blocking ----------------------------------------------------
    Bb = max(1, min(block_b, B))
    # Keep the per-step footprint (double-buffered history dominates) well
    # under the smallest scoped-VMEM default (16 MiB v5e; 32 MiB v6e/v7x).
    itm = jnp.dtype(matmul_dtype).itemsize
    otm = jnp.dtype(out_dtype).itemsize

    def step_bytes(bb):
        return (2 * bb * S * H * itm                 # history, double-buffered
                + 2 * bb * (A + S) * 4               # c_att + mask bias
                + 2 * bb * (H + S) * otm             # outputs
                + H * A * itm + A * 4)               # weights

    while Bb > 8 and step_bytes(Bb) > (12 << 20):
        Bb = max(8, Bb // 2)
    # Guarantee >= 2 grid steps (when B allows a sublane-dense split) so the
    # "parallel" batch axis can shard across v7x's two TensorCores.
    if B > 8 and pl.cdiv(B, Bb) < 2:
        Bb = ((pl.cdiv(B, 2) + 7) // 8) * 8
    nb = pl.cdiv(B, Bb)
    Bp = nb * Bb

    if Bp != B:
        pad = Bp - B
        hist_mm = jnp.pad(hist_mm, ((0, pad), (0, 0), (0, 0)))
        c_att = jnp.pad(c_att, ((0, pad), (0, 0)))
        bias = jnp.pad(bias, ((0, pad), (0, 0)), constant_values=-jnp.inf)

    # Flatten history so the kernel's scoring matmul consumes it directly
    # (no in-kernel reshape of bf16 data).
    hist_flat = hist_mm.reshape(Bp * S, H)

    att2, score2 = pl.pallas_call(
        _single_attention_kernel,
        out_shape=(
            jax.ShapeDtypeStruct((Bp, H), out_dtype),
            jax.ShapeDtypeStruct((Bp, S), out_dtype),
        ),
        grid_spec=pltpu.PrefetchScalarGridSpec(
            num_scalar_prefetch=0,
            grid=(nb,),
            in_specs=[
                pl.BlockSpec((Bb * S, H), lambda b: (b, 0)),   # history (flat bf16)
                pl.BlockSpec((Bb, A), lambda b: (b, 0)),       # context @ Wc
                pl.BlockSpec((Bb, S), lambda b: (b, 0)),       # additive mask bias
                pl.BlockSpec((H, A), lambda b: (0, 0)),        # W_history (bf16)
                pl.BlockSpec((1, A), lambda b: (0, 0)),        # v row (f32)
            ],
            out_specs=[
                pl.BlockSpec((Bb, H), lambda b: (b, 0)),       # att_applied
                pl.BlockSpec((Bb, S), lambda b: (b, 0)),       # scores
            ],
        ),
        compiler_params=pltpu.CompilerParams(
            dimension_semantics=("parallel",)),
    )(hist_flat, c_att, bias, wh_mm, wv_f32)

    att = att2[:B]                        # (B, H)
    scores = score2[:B][:, None, :]       # (B, 1, S) — module's swapaxes(1,2) layout
    return att, scores


def single_attention_reference(history, context, a_mask, b_mask, wh, wc, wv_row,
                               matmul_dtype=jnp.bfloat16):
    """Pure-JAX reference mirroring the PyTorch module (matmul inputs cast to
    matmul_dtype to match the kernel's MXU feeds; accumulation in f32)."""
    mask = ~(a_mask | b_mask)                                          # (B, S)
    h_att = jnp.dot(history.astype(matmul_dtype), wh.astype(matmul_dtype),
                    preferred_element_type=jnp.float32)                # (B, S, A)
    c_att = jnp.dot(context, wc).astype(jnp.float32)[:, None, :]       # (B, 1, A)
    score = jnp.sum(jnp.tanh(h_att + c_att) *
                    wv_row.reshape(-1).astype(jnp.float32),
                    axis=-1, keepdims=True)                            # (B, S, 1)
    score = jnp.where(mask[..., None], -jnp.inf, score)
    score = jax.nn.softmax(score, axis=1)
    score = jnp.where(mask[..., None], 0.0, score)
    score = jnp.swapaxes(score, 1, 2)                                  # (B, 1, S)
    hist_f32 = history.astype(matmul_dtype).astype(jnp.float32)
    att = jnp.einsum('bos,bsh->boh', score, hist_f32)[:, 0]            # (B, H)
    return att, score


if __name__ == "__main__":
    B, S = 2, 8
    history_in_dim, context_dim, att_dim = 32, 16, 32

    key = jax.random.PRNGKey(0)
    k_hist, k_ctx, k_wh, k_wc, k_wv, k2 = jax.random.split(key, 6)

    history = jax.random.normal(k_hist, (B, S, history_in_dim), jnp.float32)
    context = jax.random.normal(k_ctx, (B, context_dim), jnp.float32)

    # Deterministic masks; each row has at least one position with a|b True.
    a_mask = jnp.array([[1, 0, 1, 0, 1, 0, 1, 0],
                        [0, 0, 1, 1, 0, 0, 1, 1]], dtype=bool)
    b_mask = jnp.array([[0, 1, 0, 0, 0, 0, 0, 1],
                        [1, 0, 0, 0, 1, 0, 0, 0]], dtype=bool)

    # nn.Linear(bias=False)-style deterministic init (stored as (in, out)).
    def init_w(k, fan_in, fan_out):
        bound = 1.0 / math.sqrt(fan_in)
        return jax.random.uniform(k, (fan_in, fan_out), jnp.float32, -bound, bound)

    wh = init_w(k_wh, history_in_dim, att_dim)       # history: Linear(H, A)
    wc = init_w(k_wc, context_dim, att_dim)          # context: Linear(C, A)
    wv_row = init_w(k_wv, att_dim, 1).T              # v: Linear(A, 1), stored (1, A)

    # --- case 1: tiny batch, single grid step -------------------------------
    att, scores = single_attention(history, context, a_mask, b_mask, wh, wc, wv_row)
    att, scores = jax.block_until_ready((att, scores))
    att_ref, scores_ref = single_attention_reference(
        history, context, a_mask, b_mask, wh, wc, wv_row)

    assert att.shape == (B, history_in_dim)
    assert scores.shape == (B, 1, S)
    # Tolerance covers the EUP approximate reciprocal in the softmax.
    assert jnp.allclose(att, att_ref, rtol=5e-3, atol=5e-3)
    assert jnp.allclose(scores, scores_ref, rtol=5e-3, atol=5e-3)

    # --- case 2: multi-step grid, batch padding, nb>=2 split path -----------
    B2 = 20
    kh2, kc2, ka2, kb2 = jax.random.split(k2, 4)
    history2 = jax.random.normal(kh2, (B2, S, history_in_dim), jnp.float32)
    context2 = jax.random.normal(kc2, (B2, context_dim), jnp.float32)
    a_mask2 = jax.random.bernoulli(ka2, 0.5, (B2, S))
    b_mask2 = jax.random.bernoulli(kb2, 0.5, (B2, S))

    att2, scores2 = single_attention(history2, context2, a_mask2, b_mask2,
                                     wh, wc, wv_row)
    att2, scores2 = jax.block_until_ready((att2, scores2))
    att2_ref, scores2_ref = single_attention_reference(
        history2, context2, a_mask2, b_mask2, wh, wc, wv_row)

    assert att2.shape == (B2, history_in_dim)
    assert scores2.shape == (B2, 1, S)
    assert jnp.allclose(att2, att2_ref, rtol=5e-3, atol=5e-3)
    assert jnp.allclose(scores2, scores2_ref, rtol=5e-3, atol=5e-3)

    print("KERNEL_OK")
</pallas_src>

<mosaic_0001>
module attributes {stable_mosaic.version = 11 : i64} {
  func.func @_single_attention_kernel(%arg0: i32, %arg1: memref<16x32xbf16, #tpu.memory_space<vmem>>, %arg2: memref<2x32xf32, #tpu.memory_space<vmem>>, %arg3: memref<2x8xf32, #tpu.memory_space<vmem>>, %arg4: memref<32x32xbf16, #tpu.memory_space<vmem>>, %arg5: memref<1x32xf32, #tpu.memory_space<vmem>>, %arg6: memref<2x32xf32, #tpu.memory_space<vmem>>, %arg7: memref<2x8xf32, #tpu.memory_space<vmem>>) attributes {dimension_semantics = [#tpu.dimension_semantics<parallel>], iteration_bounds = array<i64: 1>, scalar_prefetch = 0 : i64, scratch_operands = 0 : i64, tpu.core_type = #tpu.core_type<tc>, window_params = [{transform_indices = @transform_0, window_bounds = array<i64: 16, 32>}, {transform_indices = @transform_1, window_bounds = array<i64: 2, 32>}, {transform_indices = @transform_2, window_bounds = array<i64: 2, 8>}, {pipeline_mode = #tpu.pipeline_mode<synchronous>, transform_indices = @transform_3, window_bounds = array<i64: 32, 32>}, {pipeline_mode = #tpu.pipeline_mode<synchronous>, transform_indices = @transform_4, window_bounds = array<i64: 1, 32>}, {transform_indices = @transform_5, window_bounds = array<i64: 2, 32>}, {transform_indices = @transform_6, window_bounds = array<i64: 2, 8>}]} {
    %c0 = arith.constant 0 : index
    %c0_0 = arith.constant 0 : index
    %0 = vector.load %arg1[%c0, %c0_0] : memref<16x32xbf16, #tpu.memory_space<vmem>>, vector<16x32xbf16>
    %c0_1 = arith.constant 0 : index
    %c0_2 = arith.constant 0 : index
    %1 = vector.load %arg4[%c0_1, %c0_2] : memref<32x32xbf16, #tpu.memory_space<vmem>>, vector<32x32xbf16>
    %cst = arith.constant dense<0.000000e+00> : vector<16x32xf32>
    %2 = tpu.matmul %0, %1, %cst {dimension_numbers = #tpu.dot_dimension_numbers<[1], [0], [0], [1], [0, 0, 1, 1], [], []>} : vector<16x32xbf16>, vector<32x32xbf16>, vector<16x32xf32> -> vector<16x32xf32>
    %3 = vector.shape_cast %2 : vector<16x32xf32> to vector<2x8x32xf32>
    %c0_3 = arith.constant 0 : index
    %c0_4 = arith.constant 0 : index
    %4 = vector.load %arg2[%c0_3, %c0_4] : memref<2x32xf32, #tpu.memory_space<vmem>>, vector<2x32xf32>
    %5 = vector.shape_cast %4 : vector<2x32xf32> to vector<2x1x32xf32>
    %6 = vector.broadcast %5 : vector<2x1x32xf32> to vector<2x8x32xf32>
    %7 = arith.addf %3, %6 : vector<2x8x32xf32>
    %8 = math.tanh %7 : vector<2x8x32xf32>
    %c0_5 = arith.constant 0 : index
    %c0_6 = arith.constant 0 : index
    %9 = vector.load %arg5[%c0_5, %c0_6] : memref<1x32xf32, #tpu.memory_space<vmem>>, vector<1x32xf32>
    %10 = vector.shape_cast %9 : vector<1x32xf32> to vector<1x1x32xf32>
    %11 = vector.broadcast %10 : vector<1x1x32xf32> to vector<2x8x32xf32>
    %12 = arith.mulf %8, %11 : vector<2x8x32xf32>
    %cst_7 = arith.constant dense<0.000000e+00> : vector<2x8xf32>
    %13 = vector.multi_reduction <add>, %12, %cst_7 [2] : vector<2x8x32xf32> to vector<2x8xf32>
    %c0_8 = arith.constant 0 : index
    %c0_9 = arith.constant 0 : index
    %14 = vector.load %arg3[%c0_8, %c0_9] : memref<2x8xf32, #tpu.memory_space<vmem>>, vector<2x8xf32>
    %15 = arith.addf %13, %14 : vector<2x8xf32>
    %cst_10 = arith.constant dense<0xFF800000> : vector<2xf32>
    %16 = vector.multi_reduction <maximumf>, %15, %cst_10 [1] : vector<2x8xf32> to vector<2xf32>
    %17 = vector.shape_cast %16 : vector<2xf32> to vector<2x1xf32>
    %cst_11 = arith.constant -1.000000e+30 : f32
    %18 = vector.broadcast %cst_11 : f32 to vector<2x1xf32>
    %19 = arith.maximumf %17, %18 : vector<2x1xf32>
    %20 = vector.broadcast %19 : vector<2x1xf32> to vector<2x8xf32>
    %21 = arith.subf %15, %20 : vector<2x8xf32>
    %22 = math.exp %21 : vector<2x8xf32>
    %cst_12 = arith.constant dense<0.000000e+00> : vector<2xf32>
    %23 = vector.multi_reduction <add>, %22, %cst_12 [1] : vector<2x8xf32> to vector<2xf32>
    %24 = vector.shape_cast %23 : vector<2xf32> to vector<2x1xf32>
    %25 = tpu.reciprocal %24 {approx = true} : vector<2x1xf32> -> vector<2x1xf32>
    %26 = vector.broadcast %25 : vector<2x1xf32> to vector<2x8xf32>
    %27 = arith.mulf %22, %26 : vector<2x8xf32>
    %cst_13 = arith.constant 0.000000e+00 : f32
    %28 = vector.broadcast %cst_13 : f32 to vector<2x1xf32>
    %29 = arith.cmpf ogt, %24, %28 : vector<2x1xf32>
    %cst_14 = arith.constant 0.000000e+00 : f32
    %30 = vector.shape_cast %29 : vector<2x1xi1> to vector<2x1xi1>
    %31 = vector.broadcast %30 : vector<2x1xi1> to vector<2x8xi1>
    %32 = vector.broadcast %cst_14 : f32 to vector<2x8xf32>
    %33 = arith.select %31, %27, %32 : vector<2x8xi1>, vector<2x8xf32>
    %c0_15 = arith.constant 0 : index
    %c0_16 = arith.constant 0 : index
    %34 = vector.load %arg7[%c0_15, %c0_16] : memref<2x8xf32, #tpu.memory_space<vmem>>, vector<2x8xf32>
    tpu.vector_store %arg7[%c0_15, %c0_16], %33 {strides = array<i32>} : memref<2x8xf32, #tpu.memory_space<vmem>>, vector<2x8xf32>,
    %35 = arith.extf %0 : vector<16x32xbf16> to vector<16x32xf32>
    %36 = vector.shape_cast %35 : vector<16x32xf32> to vector<2x8x32xf32>
    %37 = vector.shape_cast %33 : vector<2x8xf32> to vector<2x8x1xf32>
    %38 = vector.broadcast %37 : vector<2x8x1xf32> to vector<2x8x32xf32>
    %39 = arith.mulf %38, %36 : vector<2x8x32xf32>
    %cst_17 = arith.constant dense<0.000000e+00> : vector<2x32xf32>
    %40 = vector.multi_reduction <add>, %39, %cst_17 [1] : vector<2x8x32xf32> to vector<2x32xf32>
    %c0_18 = arith.constant 0 : index
    %c0_19 = arith.constant 0 : index
    %41 = vector.load %arg6[%c0_18, %c0_19] : memref<2x32xf32, #tpu.memory_space<vmem>>, vector<2x32xf32>
    tpu.vector_store %arg6[%c0_18, %c0_19], %40 {strides = array<i32>} : memref<2x32xf32, #tpu.memory_space<vmem>>, vector<2x32xf32>,
    return
  }
  func.func @transform_0(%arg0: i32) -> (i32, i32) {
    %c0_i32 = arith.constant 0 : i32
    %c0_i32_0 = arith.constant 0 : i32
    return %arg0, %c0_i32 : i32, i32
  }
  func.func @transform_1(%arg0: i32) -> (i32, i32) {
    %c0_i32 = arith.constant 0 : i32
    %c0_i32_0 = arith.constant 0 : i32
    return %arg0, %c0_i32 : i32, i32
  }
  func.func @transform_2(%arg0: i32) -> (i32, i32) {
    %c0_i32 = arith.constant 0 : i32
    %c0_i32_0 = arith.constant 0 : i32
    return %arg0, %c0_i32 : i32, i32
  }
  func.func @transform_3(%arg0: i32) -> (i32, i32) {
    %c0_i32 = arith.constant 0 : i32
    %c0_i32_0 = arith.constant 0 : i32
    %c0_i32_1 = arith.constant 0 : i32
    return %c0_i32, %c0_i32_0 : i32, i32
  }
  func.func @transform_4(%arg0: i32) -> (i32, i32) {
    %c0_i32 = arith.constant 0 : i32
    %c0_i32_0 = arith.constant 0 : i32
    %c0_i32_1 = arith.constant 0 : i32
    return %c0_i32, %c0_i32_0 : i32, i32
  }
  func.func @transform_5(%arg0: i32) -> (i32, i32) {
    %c0_i32 = arith.constant 0 : i32
    %c0_i32_0 = arith.constant 0 : i32
    return %arg0, %c0_i32 : i32, i32
  }
  func.func @transform_6(%arg0: i32) -> (i32, i32) {
    %c0_i32 = arith.constant 0 : i32
    %c0_i32_0 = arith.constant 0 : i32
    return %arg0, %c0_i32 : i32, i32
  }
}

</mosaic_0001>

<llo_original>
// kernel: tpu_custom_call.1
$region0: #{tpu_custom_call.1}
  #allocation0 [shape = 'u32[]', space=smem, size = 0x4, offset = 0x4, fixed_abs, tag = 'smem constant byte address 0x4 - core index']
  #allocation1 [shape = 'u32[72,128]{1,0:T(1,128)}', space=vmem, size = 0x9000, scoped, tag = 'internal scratch']
  %s0 = inlined_call_operand.hbm [shape: bf16[16,32], index: 0, kind: input, shape index: {}]
  %s1 = inlined_call_operand.hbm [shape: f32[2,32], index: 1, kind: input, shape index: {}]
  %s2 = inlined_call_operand.hbm [shape: f32[2,8], index: 2, kind: input, shape index: {}]
  %s3 = inlined_call_operand.hbm [shape: bf16[32,32], index: 3, kind: input, shape index: {}]
  %s4 = inlined_call_operand.vmem [shape: f32[1,32], index: 4, kind: input, shape index: {}]
  %s5 = inlined_call_operand.hbm [shape: f32[2,32], index: 5, kind: output, shape index: {0}]
  %s6 = inlined_call_operand.hbm [shape: f32[2,8], index: 6, kind: output, shape index: {1}]
  %7 = xla_tuple %s5, %s6
  %s8 = sld [smem:[#allocation0]]
  $region54: #{tpu_custom_call.1} parent=0
    _
  %s10 = ssub.s32 1, %s8
  %s11 = scalar_select 0, %s10, %s8
  $region1: #{tpu_custom_call.1} parent=0
    #allocation2 [shape = 'u8[4096]{0}', space=vmem, size = 0x1000, scoped, tag = 'input window, operand 0, single buffered']
    #allocation3 [shape = 's32[1]{0}', space=sflag, size = 0x4, scoped, tag = 'scoped memory for tpu_custom_call.1']
    #allocation4 [shape = 's32[1]{0}', space=sflag, size = 0x4, scoped, tag = 'scoped memory for tpu_custom_call.1']
    #allocation5 [shape = 'u8[1024]{0}', space=vmem, size = 0x400, scoped, tag = 'input window, operand 1, single buffered']
    #allocation6 [shape = 's32[1]{0}', space=sflag, size = 0x4, scoped, tag = 'scoped memory for tpu_custom_call.1']
    #allocation7 [shape = 'u8[1024]{0}', space=vmem, size = 0x400, scoped, tag = 'input window, operand 2, single buffered']
    #allocation8 [shape = 'u8[8192]{0}', space=vmem, size = 0x2000, scoped, tag = 'input window, operand 3, single buffered']
    #allocation9 [shape = 's32[1]{0}', space=sflag, size = 0x4, scoped, tag = 'scoped memory for tpu_custom_call.1']
    #allocation10 [shape = 'u8[1024]{0}', space=vmem, size = 0x400, scoped, tag = 'output window, operand 0, single buffered']
    #allocation11 [shape = 'u8[1024]{0}', space=vmem, size = 0x400, scoped, tag = 'output window, operand 1, single buffered']
    #allocation12 [shape = 's32[1]{0}', space=sflag, size = 0x4, scoped, tag = 'scoped memory for tpu_custom_call.1']
    %12 = vsyncpa [#allocation3], 0
    %13 = vsyncpa [#allocation6], 0
    %14 = vsyncpa [#allocation9], 0
    %15 = vsyncpa [#allocation4], 0
    %16 = vsyncpa [#allocation12], 0
    // Predicated region
    $region2: #{tpu_custom_call.1} parent=1 // pred_check
      _
    $region3: #{tpu_custom_call.1} parent=1 // pred_check_branch
      %18 = sbr.rel (0) target = $region5
    $region4: #{tpu_custom_call.1} parent=1 // pred_region
      %20 = vsyncadd [#allocation3], 0
      %s21 = sshll.u32 %s0, 4
      %s22 = int_to_ptr.hbm [resolvable:$true] %s21
      %s23 = sshll.u32 [#allocation2], 4
      %s24 = int_to_ptr.vmem [resolvable:$true] %s23
      %29 = dma.hbm_to_vmem [thread:$0]  %s22, 128, %s24, [#allocation3], 64, 64, 4
    $region5: #{tpu_custom_call.1} parent=1 // pred_fallthru
      _
    // Predicated region
    $region6: #{tpu_custom_call.1} parent=1 // pred_check
      _
    $region7: #{tpu_custom_call.1} parent=1 // pred_check_branch
      %31 = sbr.rel (0) target = $region9
    $region8: #{tpu_custom_call.1} parent=1 // pred_region
      %33 = vsyncadd [#allocation6], 0
      %s35 = sshll.u32 %s1, 4
      %s36 = int_to_ptr.hbm [resolvable:$true] %s35
      %s37 = sshll.u32 [#allocation5], 4
      %s38 = int_to_ptr.vmem [resolvable:$true] %s37
      %40 = dma.hbm_to_vmem [thread:$0]  %s36, 32, %s38, [#allocation6]
    $region9: #{tpu_custom_call.1} parent=1 // pred_fallthru
      _
    // Predicated region
    $region10: #{tpu_custom_call.1} parent=1 // pred_check
      _
    $region11: #{tpu_custom_call.1} parent=1 // pred_check_branch
      %42 = sbr.rel (0) target = $region13
    $region12: #{tpu_custom_call.1} parent=1 // pred_region
      %44 = vsyncadd [#allocation6], 0
      %s46 = sshll.u32 %s2, 4
      %s47 = int_to_ptr.hbm [resolvable:$true] %s46
      %s48 = sshll.u32 [#allocation7], 4
      %s49 = int_to_ptr.vmem [resolvable:$true] %s48
      %51 = dma.hbm_to_vmem [thread:$0]  %s47, 32, %s49, [#allocation6]
    $region13: #{tpu_custom_call.1} parent=1 // pred_fallthru
      _
    // Predicated region
    $region14: #{tpu_custom_call.1} parent=1 // pred_check
      _
    $region15: #{tpu_custom_call.1} parent=1 // pred_check_branch
      %53 = sbr.rel (0) target = $region17
    $region16: #{tpu_custom_call.1} parent=1 // pred_region
      %55 = vsyncadd [#allocation9], 0
      %s56 = sshll.u32 %s3, 4
      %s57 = int_to_ptr.hbm [resolvable:$true] %s56
      %s58 = sshll.u32 [#allocation8], 4
      %s59 = int_to_ptr.vmem [resolvable:$true] %s58
      %64 = dma.hbm_to_vmem [thread:$0]  %s57, 256, %s59, [#allocation9], 64, 64, 4
    $region17: #{tpu_custom_call.1} parent=1 // pred_fallthru
      _
    // Predicated region
    $region18: #{tpu_custom_call.1} parent=1 // pred_check
      _
    $region19: #{tpu_custom_call.1} parent=1 // pred_check_branch
      %66 = sbr.rel (0) target = $region21
    $region20: #{tpu_custom_call.1} parent=1 // pred_region
      _
    $region21: #{tpu_custom_call.1} parent=1 // pred_fallthru
      _
    // Predicated region
    $region22: #{tpu_custom_call.1} parent=1 // pred_check
      _
    $region23: #{tpu_custom_call.1} parent=1 // pred_check_branch
      %68 = sbr.rel (0) target = $region25
    $region24: #{tpu_custom_call.1} parent=1 // pred_region
      %70 = dma.done [#allocation3], 128
    $region25: #{tpu_custom_call.1} parent=1 // pred_fallthru
      _
    // Predicated region
    $region26: #{tpu_custom_call.1} parent=1 // pred_check
      _
    $region27: #{tpu_custom_call.1} parent=1 // pred_check_branch
      %72 = sbr.rel (0) target = $region29
    $region28: #{tpu_custom_call.1} parent=1 // pred_region
      %74 = dma.done [#allocation6], 32
    $region29: #{tpu_custom_call.1} parent=1 // pred_fallthru
      _
    // Predicated region
    $region30: #{tpu_custom_call.1} parent=1 // pred_check
      _
    $region31: #{tpu_custom_call.1} parent=1 // pred_check_branch
      %76 = sbr.rel (0) target = $region33
    $region32: #{tpu_custom_call.1} parent=1 // pred_region
      %78 = dma.done [#allocation6], 32
    $region33: #{tpu_custom_call.1} parent=1 // pred_fallthru
      _
    // Predicated region
    $region34: #{tpu_custom_call.1} parent=1 // pred_check
      _
    $region35: #{tpu_custom_call.1} parent=1 // pred_check_branch
      %80 = sbr.rel (0) target = $region37
    $region36: #{tpu_custom_call.1} parent=1 // pred_region
      %82 = dma.done [#allocation9], 256
    $region37: #{tpu_custom_call.1} parent=1 // pred_fallthru
      _
    %v84 = vld [vmem:[#allocation2] sm:$0xf]
    %v85 = vld [vmem:[#allocation2 + $0x4] sm:$0xf]
    %v86 = vld [vmem:[#allocation8] sm:$0xf]
    %v87 = vld [vmem:[#allocation8 + $0x4] sm:$0xf]
    %v88 = vld [vmem:[#allocation8 + $0x8] sm:$0xf]
    %v89 = vld [vmem:[#allocation8 + $0xc] sm:$0xf]
    %v92 = vunpack.c.l.b16 %v84
    %v93 = vunpack.c.l.b16 %v85
    %v94 = vpack.c.b16 %v93, %v92
    %v99 = vunpack.c.l.b16 %v86
    %v100 = vunpack.c.l.b16 %v87
    %v101 = vunpack.c.l.b16 %v88
    %v102 = vunpack.c.l.b16 %v89
    %v103 = vpack.c.b16 %v100, %v99
    %v104 = vpack.c.b16 %v102, %v101
    %vm107 = vcmask 261120
    %v109 = vsel %vm107, %v94, 0
    %111 = vmatpush.bf16.msra.mxu0 0
    %112 = vmatpush.bf16.msra.mxu0 0
    %113 = vmatpush.bf16.msra.mxu0 0
    %114 = vmatpush.bf16.msra.mxu0 0
    %115 = vmatpush.bf16.msra.mxu0 0
    %116 = vmatpush.bf16.msra.mxu0 0
    %117 = vmatpush.bf16.msra.mxu0 %v104
    %118 = vmatpush.bf16.msra.mxu0 %v103
    %119 = vmatmul.bf16.gmra.mxu0 %v109
    %v120 = vpop.f32.mrf.mxu0
    %v121 = vadd.f32 0.0, %v120
    %v122 = vpop.f32.mrf.mxu0
    %v123 = vadd.f32 0.0, %v122
    %124 = vdwg.mxu0
    %v125 = vld [vmem:[#allocation5] sm:$0x3]
    %v127 = vrot.slane %v125, 1
    %v128 = vperm.slane %v125, 0
    %v129 = vperm.slane %v127, 0
    %v132 = vadd.f32 %v121, %v128
    %v133 = vadd.f32 %v123, %v129
    %v134 = vtanh.pop %v132
    %v135 = vtanh.pop %v133
    %v136 = vld [vmem:[%s4] sm:$0x1]
    %v138 = vperm.slane %v136, 0
    %v140 = vmul.f32 %v134, %v138
    %v141 = vmul.f32 %v135, %v138
    %v142 = vsel %vm107, %v140, 0.0
    %143 = vadd.xlane.f32.xlu0 %v142
    %v144 = vpop.xlane.xlu0 %143
    %v145 = vsel %vm107, %v141, 0.0
    %146 = vadd.xlane.f32.xlu0 %v145
    %v147 = vpop.xlane.xlu0 %146
    %v148 = vld [vmem:[#allocation7] sm:$0x3]
    %v150 = vperm.slane %v148, 0
    %v151 = vlaneseq
    %v152 = vshrl.u32 %v151, 7
    %154 = vset.pattern.permute.xlu0 %v152
    %155 = vperm.xlu0 %154, %v150
    %v156 = vpop.permute.xlu0 %155
    %v157 = vperm.slane %v148, 1
    %v158 = vlaneseq
    %v159 = vshrl.u32 %v158, 7
    %161 = vset.pattern.permute.xlu0 %v159
    %162 = vperm.xlu0 %161, %v157
    %v163 = vpop.permute.xlu0 %162
    %v166 = vadd.f32 %v144, %v156
    %v167 = vadd.f32 %v147, %v163
    %170 = vset.pattern.permute.xlu0 0
    %171 = vperm.xlu0 %170, %v166
    %v172 = vpop.permute.xlu0 %171
    %173 = vset.pattern.permute.xlu0 0
    %174 = vperm.xlu0 %173, %v167
    %v175 = vpop.permute.xlu0 %174
    %v176 = vlaneseq
    %v177 = vand.u32 %v176, 127
    %v178 = vperm.slane %v172, %v177
    %v179 = vperm.slane %v175, %v177
    %vm180 = vcmask 1041409
    %v181 = vsel %vm180, %v179, %v178
    %vm183 = vcmask 58368
    %v184 = vsel %vm183, %v181, -inf
    %185 = vmax.xlane.f32.xlu0 %v184
    %v186 = vpop.xlane.xlu0 %185
    %v187 = vmax.f32 %v186, -1e+30
    %v189 = vperm.slane %v187, 0
    %v190 = vperm.slane %v187, 1
    %v193 = vsub.f32 %v166, %v189
    %v194 = vsub.f32 %v167, %v190
    %v195 = vmul.f32 %v193, 1.442695
    %v196 = vpow.pop %v195
    %v197 = vmul.f32 %v194, 1.442695
    %v198 = vpow.pop %v197
    %201 = vset.pattern.permute.xlu0 0
    %202 = vperm.xlu0 %201, %v196
    %v203 = vpop.permute.xlu0 %202
    %204 = vset.pattern.permute.xlu0 0
    %205 = vperm.xlu0 %204, %v198
    %v206 = vpop.permute.xlu0 %205
    %v207 = vperm.slane %v203, %v177
    %v208 = vperm.slane %v206, %v177
    %v209 = vsel %vm180, %v208, %v207
    %v211 = vsel %vm183, %v209, 0.0
    %212 = vadd.xlane.f32.xlu0 %v211
    %v213 = vpop.xlane.xlu0 %212
    %v214 = vrcp.pop %v213
    %v216 = vperm.slane %v214, 0
    %v217 = vperm.slane %v214, 1
    %v220 = vmul.f32 %v196, %v216
    %v221 = vmul.f32 %v198, %v217
    %vm222 = vcmp.gt.f32.partialorder %v213, 0.0
    %v223 = vsel %vm222, 1, 0
    %vm224 = vcmp.eq.s32.totalorder %v223, 1
    %227 = vset.pattern.permute.xlu0 0
    %228 = vperm.xlu0 %227, %v220
    %v229 = vpop.permute.xlu0 %228
    %230 = vset.pattern.permute.xlu0 0
    %231 = vperm.xlu0 %230, %v221
    %v232 = vpop.permute.xlu0 %231
    %v233 = vperm.slane %v229, %v177
    %v234 = vperm.slane %v232, %v177
    %v235 = vsel %vm180, %v234, %v233
    %v237 = vsel %vm224, %v235, 0.0
    %238 = vst.msk [vmem:[#allocation11] sm:$0x3] %vm183, %v237
    %v239 = vunpack.c.l.bf16 %v84
    %v240 = vunpack.c.l.bf16 %v85
    %v241 = vperm.slane %v237, 0
    %v242 = vlaneseq
    %v243 = vshrl.u32 %v242, 7
    %245 = vset.pattern.permute.xlu0 %v243
    %246 = vperm.xlu0 %245, %v241
    %v247 = vpop.permute.xlu0 %246
    %v248 = vperm.slane %v237, 1
    %v249 = vlaneseq
    %v250 = vshrl.u32 %v249, 7
    %252 = vset.pattern.permute.xlu0 %v250
    %253 = vperm.xlu0 %252, %v248
    %v254 = vpop.permute.xlu0 %253
    %v255 = vmul.f32 %v247, %v239
    %v256 = vmul.f32 %v254, %v240
    %v257 = vsel %vm107, %v255, 0.0
    %v258 = vrot.slane %v257, 4
    %v259 = vadd.f32 %v257, %v258
    %v260 = vrot.slane %v259, 2
    %v261 = vadd.f32 %v259, %v260
    %v262 = vrot.slane %v261, 1
    %v263 = vadd.f32 %v261, %v262
    %v264 = vsel %vm107, %v256, 0.0
    %v265 = vrot.slane %v264, 4
    %v266 = vadd.f32 %v264, %v265
    %v267 = vrot.slane %v266, 2
    %v268 = vadd.f32 %v266, %v267
    %v269 = vrot.slane %v268, 1
    %v270 = vadd.f32 %v268, %v269
    %v273 = vsel %vm180, %v270, %v263
    %vm275 = vcmask 254976
    %276 = vst.msk [vmem:[#allocation10] sm:$0x3] %vm275, %v273
    // Predicated region
    $region38: #{tpu_custom_call.1} parent=1 // pred_check
      _
    $region39: #{tpu_custom_call.1} parent=1 // pred_check_branch
      %278 = sbr.rel (0) target = $region41
    $region40: #{tpu_custom_call.1} parent=1 // pred_region
      %280 = vsyncadd [#allocation4], 0
      %s282 = sshll.u32 [#allocation10], 4
      %s283 = int_to_ptr.vmem [resolvable:$true] %s282
      %s284 = sshll.u32 %s5, 4
      %s285 = int_to_ptr.hbm [resolvable:$true] %s284
      %287 = dma.vmem_to_hbm [thread:$0]  %s283, 32, %s285, [#allocation4]
    $region41: #{tpu_custom_call.1} parent=1 // pred_fallthru
      _
    // Predicated region
    $region42: #{tpu_custom_call.1} parent=1 // pred_check
      _
    $region43: #{tpu_custom_call.1} parent=1 // pred_check_branch
      %289 = sbr.rel (0) target = $region45
    $region44: #{tpu_custom_call.1} parent=1 // pred_region
      %291 = vsyncadd [#allocation12], 0
      %s293 = sshll.u32 [#allocation11], 4
      %s294 = int_to_ptr.vmem [resolvable:$true] %s293
      %s295 = sshll.u32 %s6, 4
      %s296 = int_to_ptr.hbm [resolvable:$true] %s295
      %298 = dma.vmem_to_hbm [thread:$0]  %s294, 32, %s296, [#allocation12]
    $region45: #{tpu_custom_call.1} parent=1 // pred_fallthru
      _
    // Predicated region
    $region46: #{tpu_custom_call.1} parent=1 // pred_check
      _
    $region47: #{tpu_custom_call.1} parent=1 // pred_check_branch
      %300 = sbr.rel (0) target = $region49
    $region48: #{tpu_custom_call.1} parent=1 // pred_region
      %302 = dma.done [#allocation4], 32
    $region49: #{tpu_custom_call.1} parent=1 // pred_fallthru
      _
    // Predicated region
    $region50: #{tpu_custom_call.1} parent=1 // pred_check
      _
    $region51: #{tpu_custom_call.1} parent=1 // pred_check_branch
      %304 = sbr.rel (0) target = $region53
    $region52: #{tpu_custom_call.1} parent=1 // pred_region
      %306 = dma.done [#allocation12], 32
    $region53: #{tpu_custom_call.1} parent=1 // pred_fallthru
      _
    %307 = vsyncpa [#allocation3], 1
    %308 = vsyncpa [#allocation6], 1
    %309 = vsyncpa [#allocation9], 1
    %310 = vsyncpa [#allocation4], 1
    %311 = vsyncpa [#allocation12], 1

</llo_original>
